<compile_context>
chip_gen: v7x
topology: tpu7x:2x2x1
jax: 0.10.0
libtpu: 0.0.40
codegen_flags: <defaults>
</compile_context>

<pallas_src>
import numpy as np
import jax
import jax.numpy as jnp
from jax.experimental import pallas as pl
from jax.experimental.pallas import tpu as pltpu


# ----------------------------------------------------------------------------
# Pallas kernels
# ----------------------------------------------------------------------------

def _pred_head_kernel(x_ref, w1_ref, b1_ref, w2_ref, b2_ref, o_ref):
    """Fused 1x1 conv -> (dropout skipped) -> LeakyReLU -> 1x1 conv (lane-dense output)."""
    x = x_ref[...]                                                     # (TM, C_in) bf16
    h = jnp.dot(x, w1_ref[...], preferred_element_type=jnp.float32) + b1_ref[...]
    # TODO(synk): nn.Dropout(0.3) training-mode randomness has no deterministic equivalent;
    # treated as identity (eval semantics).
    h = jnp.where(h > 0, h, 0.01 * h)                                  # LeakyReLU(0.01)
    h = h.astype(jnp.bfloat16)
    o = jnp.dot(h, w2_ref[...], preferred_element_type=jnp.float32) + b2_ref[...]
    o_ref[...] = o                                                     # (TM, OUT_PAD) f32


def pred_head_pallas(x, w1, b1, w2, b2):
    """x: (M, C_in) channels-last features.  Returns (M, 5A+C) f32 predictions."""
    n, c_in = x.shape
    hidden = w1.shape[1]
    out_dim = w2.shape[1]
    OUT_PAD = ((out_dim + 127) // 128) * 128        # 65 -> 128: lane-dense stores
    TM = 128                                        # row tile (multiple of 8)
    n_pad = ((n + TM - 1) // TM) * TM

    x_p = jnp.pad(x, ((0, n_pad - n), (0, 0))).astype(jnp.bfloat16)
    w1_b = w1.astype(jnp.bfloat16)
    w2_p = jnp.pad(w2, ((0, 0), (0, OUT_PAD - out_dim))).astype(jnp.bfloat16)
    b2_p = jnp.pad(b2, ((0, 0), (0, OUT_PAD - out_dim)))                # stays f32

    out = pl.pallas_call(
        _pred_head_kernel,
        grid=(n_pad // TM,),
        out_shape=jax.ShapeDtypeStruct((n_pad, OUT_PAD), jnp.float32),
        in_specs=[pl.BlockSpec((TM, c_in), lambda i: (i, 0)),
                  pl.BlockSpec((c_in, hidden), lambda i: (0, 0)),
                  pl.BlockSpec((1, hidden), lambda i: (0, 0)),
                  pl.BlockSpec((hidden, OUT_PAD), lambda i: (0, 0)),
                  pl.BlockSpec((1, OUT_PAD), lambda i: (0, 0))],
        out_specs=pl.BlockSpec((TM, OUT_PAD), lambda i: (i, 0)),
        compiler_params=pltpu.CompilerParams(
            dimension_semantics=("parallel",),
            vmem_limit_bytes=48 * 1024 * 1024),     # safe on v7x (64 MiB physical)
    )(x_p, w1_b, b1, w2_p, b2_p)
    return out[:n, :out_dim]


def _iou_kernel(p_ref, g_ref, o_ref):
    """IoU with proposals on lanes, GT boxes on sublanes.  p:(1,4,TM) g:(1,Np,4) -> o:(1,Np,TM)."""
    p = p_ref[0]                                    # (4, TM)
    g = g_ref[0]                                    # (N_pad, 4)
    px0, py0, px1, py1 = p[0:1, :], p[1:2, :], p[2:3, :], p[3:4, :]     # (1, TM)
    gx0, gy0, gx1, gy1 = g[:, 0:1], g[:, 1:2], g[:, 2:3], g[:, 3:4]     # (N_pad, 1)
    ix0 = jnp.maximum(px0, gx0)
    iy0 = jnp.maximum(py0, gy0)
    ix1 = jnp.minimum(px1, gx1)
    iy1 = jnp.minimum(py1, gy1)
    inter = jnp.maximum(ix1 - ix0, 0.0) * jnp.maximum(iy1 - iy0, 0.0)   # (N_pad, TM)
    area_p = (px1 - px0) * (py1 - py0)                                  # (1, TM)
    area_g = (gx1 - gx0) * (gy1 - gy0)                                  # (N_pad, 1)
    union = area_p + area_g - inter
    o_ref[0] = inter / (union + 1e-8)               # eps avoids 0/0 for degenerate boxes


def iou_pallas(anchors, bboxes):
    """anchors: (B,A,H,W,4)  bboxes: (B,N,5)  ->  (B, A*H*W, N) float32."""
    B, A, H, W, _ = anchors.shape
    N = bboxes.shape[1]
    M = A * H * W
    TM = 128
    M_pad = ((M + TM - 1) // TM) * TM
    N_pad = ((N + 7) // 8) * 8

    props_t = jnp.transpose(anchors.reshape(B, M, 4), (0, 2, 1))        # (B, 4, M): M on lanes
    props_t = jnp.pad(props_t, ((0, 0), (0, 0), (0, M_pad - M)))
    gt = jnp.pad(bboxes[:, :, :4], ((0, 0), (0, N_pad - N), (0, 0)))    # (B, N_pad, 4)

    out = pl.pallas_call(
        _iou_kernel,
        grid=(B, M_pad // TM),
        out_shape=jax.ShapeDtypeStruct((B, N_pad, M_pad), jnp.float32),
        in_specs=[pl.BlockSpec((1, 4, TM), lambda b, m: (b, 0, m)),
                  pl.BlockSpec((1, N_pad, 4), lambda b, m: (b, 0, 0))],
        out_specs=pl.BlockSpec((1, N_pad, TM), lambda b, m: (b, 0, m)),
        compiler_params=pltpu.CompilerParams(
            dimension_semantics=("parallel", "parallel")),
    )(props_t, gt)
    return jnp.transpose(out, (0, 2, 1))[:, :M, :N]                     # (B, M, N)


def _sse_kernel(a_ref, b_ref, o_ref):
    d = a_ref[...] - b_ref[...]
    s = jnp.sum(d * d, axis=1, keepdims=True)
    o_ref[...] = jnp.sum(s, axis=0, keepdims=True)


def sse_pallas(a, b):
    """sum((a-b)**2), operands flattened + zero-padded to a lane-dense (rows,128) layout."""
    LANES, SUB = 128, 8
    af = a.reshape(-1).astype(jnp.float32)
    bf = b.reshape(-1).astype(jnp.float32)
    L = af.shape[0]
    tile = LANES * SUB
    L_pad = ((L + tile - 1) // tile) * tile
    af = jnp.pad(af, (0, L_pad - L)).reshape(L_pad // LANES, LANES)
    bf = jnp.pad(bf, (0, L_pad - L)).reshape(L_pad // LANES, LANES)
    out = pl.pallas_call(
        _sse_kernel,
        grid=(1,),
        out_shape=jax.ShapeDtypeStruct((1, 1), jnp.float32),
        in_specs=[pl.BlockSpec((L_pad // LANES, LANES), lambda i: (0, 0)),
                  pl.BlockSpec((L_pad // LANES, LANES), lambda i: (0, 0))],
        out_specs=pl.BlockSpec((1, 1), lambda i: (0, 0)),
    )(af, bf)
    return out[0, 0]


# ----------------------------------------------------------------------------
# JAX helper functions (all fixed-shape -> whole forward is jittable)
# ----------------------------------------------------------------------------

def generate_grid(batch_size, w_amap, h_amap):
    # TODO(synk): GenerateGrid not included in the reference snippet; standard A5 version.
    w_range = jnp.arange(w_amap, dtype=jnp.float32) + 0.5
    h_range = jnp.arange(h_amap, dtype=jnp.float32) + 0.5
    w_grid = jnp.tile(w_range[None, :], (h_amap, 1))
    h_grid = jnp.tile(h_range[:, None], (1, w_amap))
    grid = jnp.stack([w_grid, h_grid], axis=-1)                  # (H', W', 2)
    return jnp.tile(grid[None], (batch_size, 1, 1, 1))


def generate_anchor(anc, grid):
    """anc: (A,2) widths/heights; grid: (B,H',W',2) centers -> (B,A,H',W',4)."""
    B, H, W, _ = grid.shape
    A = anc.shape[0]
    centers = jnp.concatenate([grid, grid], axis=-1)             # (B,H,W,4) = (x,y,x,y)
    centers = jnp.broadcast_to(centers[:, None], (B, A, H, W, 4))
    half = anc / 2.0
    delta = jnp.concatenate([-half, half], axis=-1)              # (A,4)
    return centers + delta[None, :, None, None, :]


def reference_on_activated_anchors_jax(anchors, bboxes, grid, iou_mat, neg_thresh=0.3):
    """Fixed-shape, fully-JAX YOLO anchor matching (one activated anchor slot per GT box)."""
    # TODO(synk): ReferenceOnActivatedAnchors not provided in the spec; YOLO branch reconstructed,
    # random negative sampling replaced by deterministic lowest-max-IoU selection.
    B, A, H, W, _ = anchors.shape
    N = bboxes.shape[1]
    HW = H * W
    valid = (bboxes[:, :, 0] != -1).astype(jnp.float32)                  # (B, N)

    centers = (bboxes[:, :, :2] + bboxes[:, :, 2:4]) * 0.5               # (B,N,2)
    grid_flat = grid.reshape(B, HW, 2)
    mah = jnp.sum(jnp.abs(grid_flat[:, :, None, :] - centers[:, None, :, :]), axis=-1)
    cell = jnp.argmin(mah, axis=1)                                       # (B,N)

    iou_r = iou_mat.reshape(B, A, HW, N)
    cell_idx = jnp.broadcast_to(cell[:, None, None, :], (B, A, 1, N))
    iou_cell = jnp.take_along_axis(iou_r, cell_idx, axis=2)[:, :, 0, :]  # (B, A, N)
    best_a = jnp.argmax(iou_cell, axis=1)                                # (B, N)
    gt_conf = jnp.max(iou_cell, axis=1)                                  # (B, N)

    b_idx = jnp.arange(B, dtype=jnp.int32)[:, None]
    act_ind = (b_idx * (A * HW) + best_a * HW + cell).reshape(-1).astype(jnp.int32)

    anchors_flat = anchors.reshape(B, A * HW, 4)
    local = best_a * HW + cell                                           # (B, N)
    anc_sel = jnp.take_along_axis(anchors_flat, local[:, :, None], axis=1)   # (B, N, 4)

    xy_off = (bboxes[:, :, :2] + bboxes[:, :, 2:4]
              - anc_sel[:, :, :2] - anc_sel[:, :, 2:4]) * 0.5
    gt_wh = bboxes[:, :, 2:4] - bboxes[:, :, :2]
    anc_wh = anc_sel[:, :, 2:4] - anc_sel[:, :, :2]
    ratio = jnp.where(valid[:, :, None] > 0, gt_wh / anc_wh, 1.0)
    wh_off = jnp.log(ratio)
    gt_offsets = (jnp.concatenate([xy_off, wh_off], axis=-1)
                  * valid[:, :, None]).reshape(-1, 4)

    gt_class = bboxes[:, :, 4].reshape(-1).astype(jnp.int32)

    max_iou = jnp.max(iou_mat, axis=-1).reshape(-1)                      # (B*M,)
    neg_scores = jnp.where(max_iou < neg_thresh, max_iou, jnp.inf)
    neg_ind = jnp.argsort(neg_scores)[: B * N].astype(jnp.int32)

    return act_ind, neg_ind, gt_conf.reshape(-1), gt_offsets, gt_class, valid


def conf_score_regression(conf_scores, valid_col, count):
    gt = jnp.concatenate([jnp.ones_like(valid_col), jnp.zeros_like(valid_col)], axis=0)
    mask2 = jnp.concatenate([valid_col, valid_col], axis=0)
    return sse_pallas(conf_scores * mask2, gt * mask2) / (2.0 * count)


def bbox_regression(offsets, gt_offsets, valid_col, count):
    return sse_pallas(offsets * valid_col, gt_offsets * valid_col) / count


def object_classification(class_prob, gt_class, valid, batch_size):
    # TODO(synk): ObjectClassification not included in the spec; per-image mean CE reconstructed.
    C = class_prob.shape[1]
    logp = jax.nn.log_softmax(class_prob, axis=-1)
    cls = jnp.clip(gt_class, 0, C - 1)
    ce = -jnp.take_along_axis(logp, cls[:, None], axis=1)[:, 0]
    ce = ce.reshape(batch_size, -1) * valid
    per_img = jnp.sum(ce, axis=1) / jnp.maximum(jnp.sum(valid, axis=1), 1.0)
    return jnp.mean(per_img)


# ----------------------------------------------------------------------------
# Modules
# ----------------------------------------------------------------------------

class PredictionNetworkPallas:
    def __init__(self, key, in_dim, hidden_dim=128, num_anchors=9, num_classes=20):
        assert num_classes != 0 and num_anchors != 0
        self.num_anchors = num_anchors
        self.num_classes = num_classes
        out_dim = 5 * num_anchors + num_classes
        k1, k2, k3, k4 = jax.random.split(key, 4)
        self.w1 = jax.random.normal(k1, (in_dim, hidden_dim), jnp.float32) / np.sqrt(in_dim)
        self.b1 = jax.random.normal(k2, (1, hidden_dim), jnp.float32) * 0.01
        self.w2 = jax.random.normal(k3, (hidden_dim, out_dim), jnp.float32) / np.sqrt(hidden_dim)
        self.b2 = jax.random.normal(k4, (1, out_dim), jnp.float32) * 0.01

    def _extract_anchor_data_cl(self, pred_cl, anchor_idx, A, H, W):
        """Gather (conf, tx, ty, tw, th) for flat anchor indices from channels-last predictions."""
        HW = H * W
        b = anchor_idx // (A * HW)
        a = (anchor_idx % (A * HW)) // HW
        hw = anchor_idx % HW
        row = b * HW + hw
        cols = a[:, None] * 5 + jnp.arange(5, dtype=anchor_idx.dtype)[None, :]
        return pred_cl[row[:, None], cols]                               # (M, 5)

    def _extract_class_scores_cl(self, pred_cl, anchor_idx, A, H, W):
        """Direct 2-level gather; no A-times broadcast of the class scores."""
        HW = H * W
        b = anchor_idx // (A * HW)
        hw = anchor_idx % HW
        row = b * HW + hw
        return pred_cl[row, 5 * self.num_anchors:]                       # (M, C)

    def __call__(self, features, pos_anchor_idx=None, neg_anchor_idx=None):
        B, C_in, H, W = features.shape
        A, C = self.num_anchors, self.num_classes
        x = jnp.transpose(features, (0, 2, 3, 1)).reshape(B * H * W, C_in)
        pred = pred_head_pallas(x, self.w1, self.b1, self.w2, self.b2)   # (B*H*W, 5A+C) f32

        if pos_anchor_idx is not None:
            pos = self._extract_anchor_data_cl(pred, pos_anchor_idx, A, H, W)
            neg = self._extract_anchor_data_cl(pred, neg_anchor_idx, A, H, W)
            conf_scores = jax.nn.sigmoid(
                jnp.concatenate([pos[:, 0:1], neg[:, 0:1]], axis=0))
            offsets = jnp.concatenate(
                [jax.nn.sigmoid(pos[:, 1:3]) - 0.5, pos[:, 3:5]], axis=1)
            class_scores = self._extract_class_scores_cl(pred, pos_anchor_idx, A, H, W)
        else:
            # Inference path: single relayout to the NCHW-style outputs of the original module.
            pred_bhwc = pred.reshape(B, H, W, 5 * A + C)
            class_scores = jnp.transpose(pred_bhwc[..., 5 * A:], (0, 3, 1, 2))     # (B,C,H,W)
            co = pred_bhwc[..., :5 * A].reshape(B, H, W, A, 5)
            conf_scores = jax.nn.sigmoid(jnp.transpose(co[..., 0], (0, 3, 1, 2)))  # (B,A,H,W)
            off = jnp.concatenate(
                [jax.nn.sigmoid(co[..., 1:3]) - 0.5, co[..., 3:5]], axis=-1)
            offsets = jnp.transpose(off, (0, 3, 4, 1, 2))                          # (B,A,4,H,W)
        return conf_scores, offsets, class_scores


class SingleStageDetectorPallas:
    def __init__(self, key, in_dim=32, hidden_dim=32, feat_hw=4):
        self.anchor_list = jnp.array(
            [[1.0, 1], [2, 2], [3, 3], [4, 4], [5, 5], [2, 3], [3, 2], [3, 5], [5, 3]],
            dtype=jnp.float32)
        self.num_classes = 20
        self.feat_hw = feat_hw
        k_feat, k_pred = jax.random.split(key)
        # TODO(synk): FeatureExtractor (torchvision MobileNetV2 backbone) is not reproduced;
        # deterministic avg-pool + 1x1-projection stand-in producing (B, in_dim, H', W').
        self.feat_proj = jax.random.normal(k_feat, (3, in_dim), jnp.float32) * 0.1
        self.pred_network = PredictionNetworkPallas(
            k_pred, in_dim, hidden_dim=hidden_dim,
            num_anchors=self.anchor_list.shape[0], num_classes=self.num_classes)

    def _feat_extractor(self, images):
        B, C, H, W = images.shape
        hw = self.feat_hw
        pooled = images.reshape(B, C, hw, H // hw, hw, W // hw).mean(axis=(3, 5))
        return jnp.einsum('bchw,cd->bdhw', pooled, self.feat_proj)

    def forward(self, images, bboxes):
        w_conf = w_reg = w_cls = 1.0
        features = self._feat_extractor(images)
        batch_size = features.shape[0]
        Hf, Wf = features.shape[2], features.shape[3]

        grid = generate_grid(batch_size, Wf, Hf)
        anchors = generate_anchor(self.anchor_list, grid)
        iou_mat = iou_pallas(anchors, bboxes)

        (act_ind, neg_ind, _gt_conf, gt_offsets, gt_class,
         valid) = reference_on_activated_anchors_jax(anchors, bboxes, grid, iou_mat)

        conf_scores, offsets, class_prob = self.pred_network(features, act_ind, neg_ind)

        valid_col = valid.reshape(-1, 1)
        count = jnp.maximum(jnp.sum(valid), 1.0)

        conf_loss = conf_score_regression(conf_scores, valid_col, count)
        reg_loss = bbox_regression(offsets, gt_offsets, valid_col, count)
        cls_loss = object_classification(class_prob, gt_class, valid, batch_size)
        return w_conf * conf_loss + w_reg * reg_loss + w_cls * cls_loss


# ----------------------------------------------------------------------------
# Main
# ----------------------------------------------------------------------------

if __name__ == "__main__":
    key = jax.random.PRNGKey(0)
    k_img, k_model = jax.random.split(key)

    # Small synthetic shapes consistent with the forward: images NCHW, bboxes (B,N,5) padded with -1.
    images = jax.random.normal(k_img, (2, 3, 16, 16), dtype=jnp.float32)
    bboxes = jnp.array(
        [[[0.2, 0.3, 1.0, 1.2, 5.0],
          [1.8, 2.1, 3.4, 3.3, 2.0],
          [-1.0, -1.0, -1.0, -1.0, -1.0]],
         [[0.6, 0.4, 2.8, 2.6, 10.0],
          [2.2, 2.4, 3.9, 3.7, 17.0],
          [-1.0, -1.0, -1.0, -1.0, -1.0]]], dtype=jnp.float32)

    model = SingleStageDetectorPallas(k_model, in_dim=32, hidden_dim=32, feat_hw=4)
    loss_fn = jax.jit(model.forward)           # whole forward is now jittable (no host sync)
    total_loss = loss_fn(images, bboxes)
    total_loss = jax.block_until_ready(total_loss)
    assert np.isfinite(float(total_loss)), "loss is not finite"
    print("KERNEL_OK")
</pallas_src>

<mosaic_0001>
module attributes {stable_mosaic.version = 11 : i64} {
  func.func @_pred_head_kernel(%arg0: i32, %arg1: memref<128x32xbf16, #tpu.memory_space<vmem>>, %arg2: memref<32x32xbf16, #tpu.memory_space<vmem>>, %arg3: memref<1x32xf32, #tpu.memory_space<vmem>>, %arg4: memref<32x128xbf16, #tpu.memory_space<vmem>>, %arg5: memref<1x128xf32, #tpu.memory_space<vmem>>, %arg6: memref<128x128xf32, #tpu.memory_space<vmem>>) attributes {dimension_semantics = [#tpu.dimension_semantics<parallel>], iteration_bounds = array<i64: 1>, scalar_prefetch = 0 : i64, scratch_operands = 0 : i64, tpu.core_type = #tpu.core_type<tc>, window_params = [{transform_indices = @transform_0, window_bounds = array<i64: 128, 32>}, {pipeline_mode = #tpu.pipeline_mode<synchronous>, transform_indices = @transform_1, window_bounds = array<i64: 32, 32>}, {pipeline_mode = #tpu.pipeline_mode<synchronous>, transform_indices = @transform_2, window_bounds = array<i64: 1, 32>}, {pipeline_mode = #tpu.pipeline_mode<synchronous>, transform_indices = @transform_3, window_bounds = array<i64: 32, 128>}, {pipeline_mode = #tpu.pipeline_mode<synchronous>, transform_indices = @transform_4, window_bounds = array<i64: 1, 128>}, {transform_indices = @transform_5, window_bounds = array<i64: 128, 128>}]} {
    %c0 = arith.constant 0 : index
    %c0_0 = arith.constant 0 : index
    %0 = vector.load %arg1[%c0, %c0_0] : memref<128x32xbf16, #tpu.memory_space<vmem>>, vector<128x32xbf16>
    %c0_1 = arith.constant 0 : index
    %c0_2 = arith.constant 0 : index
    %1 = vector.load %arg2[%c0_1, %c0_2] : memref<32x32xbf16, #tpu.memory_space<vmem>>, vector<32x32xbf16>
    %cst = arith.constant dense<0.000000e+00> : vector<128x32xf32>
    %2 = tpu.matmul %0, %1, %cst {dimension_numbers = #tpu.dot_dimension_numbers<[1], [0], [0], [1], [0, 0, 1, 1], [], []>} : vector<128x32xbf16>, vector<32x32xbf16>, vector<128x32xf32> -> vector<128x32xf32>
    %c0_3 = arith.constant 0 : index
    %c0_4 = arith.constant 0 : index
    %3 = vector.load %arg3[%c0_3, %c0_4] : memref<1x32xf32, #tpu.memory_space<vmem>>, vector<1x32xf32>
    %4 = vector.broadcast %3 : vector<1x32xf32> to vector<128x32xf32>
    %5 = arith.addf %2, %4 : vector<128x32xf32>
    %cst_5 = arith.constant 0.000000e+00 : f32
    %6 = vector.broadcast %cst_5 : f32 to vector<128x32xf32>
    %7 = arith.cmpf ogt, %5, %6 : vector<128x32xf32>
    %cst_6 = arith.constant 0.00999999977 : f32
    %8 = vector.broadcast %cst_6 : f32 to vector<128x32xf32>
    %9 = arith.mulf %8, %5 : vector<128x32xf32>
    %10 = arith.select %7, %5, %9 : vector<128x32xi1>, vector<128x32xf32>
    %11 = arith.truncf %10 : vector<128x32xf32> to vector<128x32xbf16>
    %c0_7 = arith.constant 0 : index
    %c0_8 = arith.constant 0 : index
    %12 = vector.load %arg4[%c0_7, %c0_8] : memref<32x128xbf16, #tpu.memory_space<vmem>>, vector<32x128xbf16>
    %cst_9 = arith.constant dense<0.000000e+00> : vector<128x128xf32>
    %13 = tpu.matmul %11, %12, %cst_9 {dimension_numbers = #tpu.dot_dimension_numbers<[1], [0], [0], [1], [0, 0, 1, 1], [], []>} : vector<128x32xbf16>, vector<32x128xbf16>, vector<128x128xf32> -> vector<128x128xf32>
    %c0_10 = arith.constant 0 : index
    %c0_11 = arith.constant 0 : index
    %14 = vector.load %arg5[%c0_10, %c0_11] : memref<1x128xf32, #tpu.memory_space<vmem>>, vector<1x128xf32>
    %15 = vector.broadcast %14 : vector<1x128xf32> to vector<128x128xf32>
    %16 = arith.addf %13, %15 : vector<128x128xf32>
    %c0_12 = arith.constant 0 : index
    %c0_13 = arith.constant 0 : index
    %17 = vector.load %arg6[%c0_12, %c0_13] : memref<128x128xf32, #tpu.memory_space<vmem>>, vector<128x128xf32>
    tpu.vector_store %arg6[%c0_12, %c0_13], %16 {strides = array<i32>} : memref<128x128xf32, #tpu.memory_space<vmem>>, vector<128x128xf32>,
    return
  }
  func.func @transform_0(%arg0: i32) -> (i32, i32) {
    %c0_i32 = arith.constant 0 : i32
    %c0_i32_0 = arith.constant 0 : i32
    return %arg0, %c0_i32 : i32, i32
  }
  func.func @transform_1(%arg0: i32) -> (i32, i32) {
    %c0_i32 = arith.constant 0 : i32
    %c0_i32_0 = arith.constant 0 : i32
    %c0_i32_1 = arith.constant 0 : i32
    return %c0_i32, %c0_i32_0 : i32, i32
  }
  func.func @transform_2(%arg0: i32) -> (i32, i32) {
    %c0_i32 = arith.constant 0 : i32
    %c0_i32_0 = arith.constant 0 : i32
    %c0_i32_1 = arith.constant 0 : i32
    return %c0_i32, %c0_i32_0 : i32, i32
  }
  func.func @transform_3(%arg0: i32) -> (i32, i32) {
    %c0_i32 = arith.constant 0 : i32
    %c0_i32_0 = arith.constant 0 : i32
    %c0_i32_1 = arith.constant 0 : i32
    return %c0_i32, %c0_i32_0 : i32, i32
  }
  func.func @transform_4(%arg0: i32) -> (i32, i32) {
    %c0_i32 = arith.constant 0 : i32
    %c0_i32_0 = arith.constant 0 : i32
    %c0_i32_1 = arith.constant 0 : i32
    return %c0_i32, %c0_i32_0 : i32, i32
  }
  func.func @transform_5(%arg0: i32) -> (i32, i32) {
    %c0_i32 = arith.constant 0 : i32
    %c0_i32_0 = arith.constant 0 : i32
    return %arg0, %c0_i32 : i32, i32
  }
}

module attributes {stable_mosaic.version = 11 : i64} {
  func.func @_iou_kernel(%arg0: i32, %arg1: i32, %arg2: memref<1x4x128xf32, #tpu.memory_space<vmem>>, %arg3: memref<1x8x4xf32, #tpu.memory_space<vmem>>, %arg4: memref<1x8x128xf32, #tpu.memory_space<vmem>>) attributes {dimension_semantics = [#tpu.dimension_semantics<parallel>, #tpu.dimension_semantics<parallel>], iteration_bounds = array<i64: 2, 2>, scalar_prefetch = 0 : i64, scratch_operands = 0 : i64, tpu.core_type = #tpu.core_type<tc>, window_params = [{transform_indices = @transform_0, window_bounds = array<i64: 1, 4, 128>}, {transform_indices = @transform_1, window_bounds = array<i64: 1, 8, 4>}, {transform_indices = @transform_2, window_bounds = array<i64: 1, 8, 128>}]} {
    %c0 = arith.constant 0 : index
    %c0_0 = arith.constant 0 : index
    %c0_1 = arith.constant 0 : index
    %0 = vector.load %arg2[%c0, %c0_0, %c0_1] : memref<1x4x128xf32, #tpu.memory_space<vmem>>, vector<1x4x128xf32>
    %1 = vector.shape_cast %0 : vector<1x4x128xf32> to vector<4x128xf32>
    %c0_2 = arith.constant 0 : index
    %c0_3 = arith.constant 0 : index
    %c0_4 = arith.constant 0 : index
    %2 = vector.load %arg3[%c0_2, %c0_3, %c0_4] : memref<1x8x4xf32, #tpu.memory_space<vmem>>, vector<1x8x4xf32>
    %3 = vector.shape_cast %2 : vector<1x8x4xf32> to vector<8x4xf32>
    %4 = vector.extract_strided_slice %1 {offsets = [0, 0], sizes = [1, 128], strides = [1, 1]} : vector<4x128xf32> to vector<1x128xf32>
    %5 = vector.extract_strided_slice %1 {offsets = [1, 0], sizes = [1, 128], strides = [1, 1]} : vector<4x128xf32> to vector<1x128xf32>
    %6 = vector.extract_strided_slice %1 {offsets = [2, 0], sizes = [1, 128], strides = [1, 1]} : vector<4x128xf32> to vector<1x128xf32>
    %7 = vector.extract_strided_slice %1 {offsets = [3, 0], sizes = [1, 128], strides = [1, 1]} : vector<4x128xf32> to vector<1x128xf32>
    %8 = vector.extract_strided_slice %3 {offsets = [0, 0], sizes = [8, 1], strides = [1, 1]} : vector<8x4xf32> to vector<8x1xf32>
    %9 = vector.extract_strided_slice %3 {offsets = [0, 1], sizes = [8, 1], strides = [1, 1]} : vector<8x4xf32> to vector<8x1xf32>
    %10 = vector.extract_strided_slice %3 {offsets = [0, 2], sizes = [8, 1], strides = [1, 1]} : vector<8x4xf32> to vector<8x1xf32>
    %11 = vector.extract_strided_slice %3 {offsets = [0, 3], sizes = [8, 1], strides = [1, 1]} : vector<8x4xf32> to vector<8x1xf32>
    %12 = vector.broadcast %4 : vector<1x128xf32> to vector<8x128xf32>
    %13 = vector.broadcast %8 : vector<8x1xf32> to vector<8x128xf32>
    %14 = arith.maximumf %12, %13 : vector<8x128xf32>
    %15 = vector.broadcast %5 : vector<1x128xf32> to vector<8x128xf32>
    %16 = vector.broadcast %9 : vector<8x1xf32> to vector<8x128xf32>
    %17 = arith.maximumf %15, %16 : vector<8x128xf32>
    %18 = vector.broadcast %6 : vector<1x128xf32> to vector<8x128xf32>
    %19 = vector.broadcast %10 : vector<8x1xf32> to vector<8x128xf32>
    %20 = arith.minimumf %18, %19 : vector<8x128xf32>
    %21 = vector.broadcast %7 : vector<1x128xf32> to vector<8x128xf32>
    %22 = vector.broadcast %11 : vector<8x1xf32> to vector<8x128xf32>
    %23 = arith.minimumf %21, %22 : vector<8x128xf32>
    %24 = arith.subf %20, %14 : vector<8x128xf32>
    %cst = arith.constant 0.000000e+00 : f32
    %25 = vector.broadcast %cst : f32 to vector<8x128xf32>
    %26 = arith.maximumf %24, %25 : vector<8x128xf32>
    %27 = arith.subf %23, %17 : vector<8x128xf32>
    %cst_5 = arith.constant 0.000000e+00 : f32
    %28 = vector.broadcast %cst_5 : f32 to vector<8x128xf32>
    %29 = arith.maximumf %27, %28 : vector<8x128xf32>
    %30 = arith.mulf %26, %29 : vector<8x128xf32>
    %31 = arith.subf %6, %4 : vector<1x128xf32>
    %32 = arith.subf %7, %5 : vector<1x128xf32>
    %33 = arith.mulf %31, %32 : vector<1x128xf32>
    %34 = arith.subf %10, %8 : vector<8x1xf32>
    %35 = arith.subf %11, %9 : vector<8x1xf32>
    %36 = arith.mulf %34, %35 : vector<8x1xf32>
    %37 = vector.broadcast %33 : vector<1x128xf32> to vector<8x128xf32>
    %38 = vector.broadcast %36 : vector<8x1xf32> to vector<8x128xf32>
    %39 = arith.addf %37, %38 : vector<8x128xf32>
    %40 = arith.subf %39, %30 : vector<8x128xf32>
    %cst_6 = arith.constant 9.99999993E-9 : f32
    %41 = vector.broadcast %cst_6 : f32 to vector<8x128xf32>
    %42 = arith.addf %40, %41 : vector<8x128xf32>
    %43 = arith.divf %30, %42 : vector<8x128xf32>
    %c0_7 = arith.constant 0 : index
    %c0_8 = arith.constant 0 : index
    %c0_9 = arith.constant 0 : index
    %44 = vector.load %arg4[%c0_7, %c0_8, %c0_9] : memref<1x8x128xf32, #tpu.memory_space<vmem>>, vector<1x8x128xf32>
    %45 = vector.shape_cast %44 : vector<1x8x128xf32> to vector<8x128xf32>
    %46 = vector.shape_cast %43 : vector<8x128xf32> to vector<1x8x128xf32>
    tpu.vector_store %arg4[%c0_7, %c0_8, %c0_9], %46 {strides = array<i32>} : memref<1x8x128xf32, #tpu.memory_space<vmem>>, vector<1x8x128xf32>,
    return
  }
  func.func @transform_0(%arg0: i32, %arg1: i32) -> (i32, i32, i32) {
    %c0_i32 = arith.constant 0 : i32
    %c0_i32_0 = arith.constant 0 : i32
    return %arg0, %c0_i32, %arg1 : i32, i32, i32
  }
  func.func @transform_1(%arg0: i32, %arg1: i32) -> (i32, i32, i32) {
    %c0_i32 = arith.constant 0 : i32
    %c0_i32_0 = arith.constant 0 : i32
    %c0_i32_1 = arith.constant 0 : i32
    return %arg0, %c0_i32, %c0_i32_0 : i32, i32, i32
  }
  func.func @transform_2(%arg0: i32, %arg1: i32) -> (i32, i32, i32) {
    %c0_i32 = arith.constant 0 : i32
    %c0_i32_0 = arith.constant 0 : i32
    return %arg0, %c0_i32, %arg1 : i32, i32, i32
  }
}

module attributes {stable_mosaic.version = 11 : i64} {
  func.func @_sse_kernel(%arg0: i32, %arg1: memref<8x128xf32, #tpu.memory_space<vmem>>, %arg2: memref<8x128xf32, #tpu.memory_space<vmem>>, %arg3: memref<1x1xf32, #tpu.memory_space<vmem>>) attributes {dimension_semantics = [#tpu.dimension_semantics<arbitrary>], iteration_bounds = array<i64: 1>, scalar_prefetch = 0 : i64, scratch_operands = 0 : i64, tpu.core_type = #tpu.core_type<tc>, window_params = [{pipeline_mode = #tpu.pipeline_mode<synchronous>, transform_indices = @transform_0, window_bounds = array<i64: 8, 128>}, {pipeline_mode = #tpu.pipeline_mode<synchronous>, transform_indices = @transform_1, window_bounds = array<i64: 8, 128>}, {pipeline_mode = #tpu.pipeline_mode<synchronous>, transform_indices = @transform_2, window_bounds = array<i64: 1, 1>}]} {
    %c0 = arith.constant 0 : index
    %c0_0 = arith.constant 0 : index
    %0 = vector.load %arg1[%c0, %c0_0] : memref<8x128xf32, #tpu.memory_space<vmem>>, vector<8x128xf32>
    %c0_1 = arith.constant 0 : index
    %c0_2 = arith.constant 0 : index
    %1 = vector.load %arg2[%c0_1, %c0_2] : memref<8x128xf32, #tpu.memory_space<vmem>>, vector<8x128xf32>
    %2 = arith.subf %0, %1 : vector<8x128xf32>
    %3 = arith.mulf %2, %2 : vector<8x128xf32>
    %cst = arith.constant dense<0.000000e+00> : vector<8xf32>
    %4 = vector.multi_reduction <add>, %3, %cst [1] : vector<8x128xf32> to vector<8xf32>
    %5 = vector.shape_cast %4 : vector<8xf32> to vector<8x1xf32>
    %cst_3 = arith.constant dense<0.000000e+00> : vector<1xf32>
    %6 = vector.multi_reduction <add>, %5, %cst_3 [0] : vector<8x1xf32> to vector<1xf32>
    %7 = vector.shape_cast %6 : vector<1xf32> to vector<1x1xf32>
    %c0_4 = arith.constant 0 : index
    %c0_5 = arith.constant 0 : index
    %8 = vector.load %arg3[%c0_4, %c0_5] : memref<1x1xf32, #tpu.memory_space<vmem>>, vector<1x1xf32>
    tpu.vector_store %arg3[%c0_4, %c0_5], %7 {strides = array<i32>} : memref<1x1xf32, #tpu.memory_space<vmem>>, vector<1x1xf32>,
    return
  }
  func.func @transform_0(%arg0: i32) -> (i32, i32) {
    %c0_i32 = arith.constant 0 : i32
    %c0_i32_0 = arith.constant 0 : i32
    %c0_i32_1 = arith.constant 0 : i32
    return %c0_i32, %c0_i32_0 : i32, i32
  }
  func.func @transform_1(%arg0: i32) -> (i32, i32) {
    %c0_i32 = arith.constant 0 : i32
    %c0_i32_0 = arith.constant 0 : i32
    %c0_i32_1 = arith.constant 0 : i32
    return %c0_i32, %c0_i32_0 : i32, i32
  }
  func.func @transform_2(%arg0: i32) -> (i32, i32) {
    %c0_i32 = arith.constant 0 : i32
    %c0_i32_0 = arith.constant 0 : i32
    %c0_i32_1 = arith.constant 0 : i32
    return %c0_i32, %c0_i32_0 : i32, i32
  }
}

</mosaic_0001>

<llo_original>
// kernel: forward.5
$region0: #{forward.5}
  #allocation0 [shape = 'u32[]', space=smem, size = 0x4, offset = 0x4, fixed_abs, tag = 'smem constant byte address 0x4 - core index']
  #allocation1 [shape = 'u32[144,128]{1,0:T(1,128)}', space=vmem, size = 0x12000, scoped, tag = 'internal scratch']
  %s0 = inlined_call_operand.vmem [shape: bf16[128,32], index: 0, kind: input, shape index: {}]
  %s1 = inlined_call_operand.vmem [shape: bf16[32,32], index: 1, kind: input, shape index: {}]
  %s2 = inlined_call_operand.vmem [shape: f32[1,32], index: 2, kind: input, shape index: {}]
  %s3 = inlined_call_operand.vmem [shape: bf16[32,128], index: 3, kind: input, shape index: {}]
  %s4 = inlined_call_operand.vmem [shape: f32[1,128], index: 4, kind: input, shape index: {}]
  %s5 = inlined_call_operand.vmem [shape: f32[128,128], index: 5, kind: output, shape index: {}]
  %s6 = sld [smem:[#allocation0]]
  $region30: #{forward.5} parent=0
    _
  %s8 = ssub.s32 1, %s6
  %s9 = scalar_select 0, %s8, %s6
  // Predicated region
  $region2: #{forward.5} parent=0 // pred_check
    _
  $region3: #{forward.5} parent=0 // pred_check_branch
    %11 = sbr.rel (0) target = $region5
  $region4: #{forward.5} parent=0 // pred_region
    _
  $region5: #{forward.5} parent=0 // pred_fallthru
    _
  // Predicated region
  $region6: #{forward.5} parent=0 // pred_check
    _
  $region7: #{forward.5} parent=0 // pred_check_branch
    %13 = sbr.rel (0) target = $region9
  $region8: #{forward.5} parent=0 // pred_region
    _
  $region9: #{forward.5} parent=0 // pred_fallthru
    _
  // Predicated region
  $region10: #{forward.5} parent=0 // pred_check
    _
  $region11: #{forward.5} parent=0 // pred_check_branch
    %15 = sbr.rel (0) target = $region13
  $region12: #{forward.5} parent=0 // pred_region
    _
  $region13: #{forward.5} parent=0 // pred_fallthru
    _
  // Predicated region
  $region14: #{forward.5} parent=0 // pred_check
    _
  $region15: #{forward.5} parent=0 // pred_check_branch
    %17 = sbr.rel (0) target = $region17
  $region16: #{forward.5} parent=0 // pred_region
    _
  $region17: #{forward.5} parent=0 // pred_fallthru
    _
  // Predicated region
  $region18: #{forward.5} parent=0 // pred_check
    _
  $region19: #{forward.5} parent=0 // pred_check_branch
    %19 = sbr.rel (0) target = $region21
  $region20: #{forward.5} parent=0 // pred_region
    _
  $region21: #{forward.5} parent=0 // pred_fallthru
    _
  %v21 = vld [vmem:[%s0] sm:$0xf]
  %v22 = vld [vmem:[%s0 + $0x4] sm:$0xf]
  %v23 = vld [vmem:[%s0 + $0x8] sm:$0xf]
  %v24 = vld [vmem:[%s0 + $0xc] sm:$0xf]
  %v25 = vld [vmem:[%s0 + $0x10] sm:$0xf]
  %v26 = vld [vmem:[%s0 + $0x14] sm:$0xf]
  %v27 = vld [vmem:[%s0 + $0x18] sm:$0xf]
  %v28 = vld [vmem:[%s0 + $0x1c] sm:$0xf]
  %v29 = vld [vmem:[%s0 + $0x20] sm:$0xf]
  %v30 = vld [vmem:[%s0 + $0x24] sm:$0xf]
  %v31 = vld [vmem:[%s0 + $0x28] sm:$0xf]
  %v32 = vld [vmem:[%s0 + $0x2c] sm:$0xf]
  %v33 = vld [vmem:[%s0 + $0x30] sm:$0xf]
  %v34 = vld [vmem:[%s0 + $0x34] sm:$0xf]
  %v35 = vld [vmem:[%s0 + $0x38] sm:$0xf]
  %v36 = vld [vmem:[%s0 + $0x3c] sm:$0xf]
  %v37 = vld [vmem:[%s1] sm:$0xf]
  %v38 = vld [vmem:[%s1 + $0x4] sm:$0xf]
  %v39 = vld [vmem:[%s1 + $0x8] sm:$0xf]
  %v40 = vld [vmem:[%s1 + $0xc] sm:$0xf]
  %v41 = vld [vmem:[%s2] sm:$0x1]
  %v43 = vlaneseq
  %v44 = vshrl.u32 %v43, 7
  %v45 = vsub.s32 0, %v44
  %v46 = vrot.slane %v41, %v45
  %v64 = vunpack.c.l.b16 %v21
  %v65 = vunpack.c.l.b16 %v22
  %v66 = vunpack.c.l.b16 %v23
  %v67 = vunpack.c.l.b16 %v24
  %v68 = vunpack.c.l.b16 %v25
  %v69 = vunpack.c.l.b16 %v26
  %v70 = vunpack.c.l.b16 %v27
  %v71 = vunpack.c.l.b16 %v28
  %v72 = vunpack.c.l.b16 %v29
  %v73 = vunpack.c.l.b16 %v30
  %v74 = vunpack.c.l.b16 %v31
  %v75 = vunpack.c.l.b16 %v32
  %v76 = vunpack.c.l.b16 %v33
  %v77 = vunpack.c.l.b16 %v34
  %v78 = vunpack.c.l.b16 %v35
  %v79 = vunpack.c.l.b16 %v36
  %v80 = vpack.c.b16 %v65, %v64
  %v81 = vpack.c.b16 %v67, %v66
  %v82 = vpack.c.b16 %v69, %v68
  %v83 = vpack.c.b16 %v71, %v70
  %v84 = vpack.c.b16 %v73, %v72
  %v85 = vpack.c.b16 %v75, %v74
  %v86 = vpack.c.b16 %v77, %v76
  %v87 = vpack.c.b16 %v79, %v78
  %v92 = vunpack.c.l.b16 %v37
  %v93 = vunpack.c.l.b16 %v38
  %v94 = vunpack.c.l.b16 %v39
  %v95 = vunpack.c.l.b16 %v40
  %v96 = vpack.c.b16 %v93, %v92
  %v97 = vpack.c.b16 %v95, %v94
  %vm100 = vcmask 261120
  %v102 = vsel %vm100, %v80, 0
  %v105 = vsel %vm100, %v81, 0
  %v108 = vsel %vm100, %v82, 0
  %v111 = vsel %vm100, %v83, 0
  %v114 = vsel %vm100, %v84, 0
  %v117 = vsel %vm100, %v85, 0
  %v120 = vsel %vm100, %v86, 0
  %v123 = vsel %vm100, %v87, 0
  %125 = vmatprep.subr.bf16.mxu0 0
  %126 = vmatpush1.bf16.msra.mxu0 %v96
  %127 = vmatprep.subr.bf16.mxu0 0
  %128 = vmatpush1.bf16.msra.mxu0 %v97
  %129 = vmatprep.subr.bf16.mxu0 0
  %130 = vmatpush1.bf16.msra.mxu0 0
  %131 = vmatprep.subr.bf16.mxu0 0
  %132 = vmatpush1.bf16.msra.mxu0 0
  %133 = vmatprep.subr.bf16.mxu0 0
  %134 = vmatpush1.bf16.msra.mxu0 0
  %135 = vmatprep.subr.bf16.mxu0 0
  %136 = vmatpush1.bf16.msra.mxu0 0
  %137 = vmatprep.subr.bf16.mxu0 0
  %138 = vmatpush1.bf16.msra.mxu0 0
  %139 = vmatprep.subr.bf16.mxu0 0
  %140 = vmatpush1.bf16.msra.mxu0 0
  %141 = vmatprep.subr.bf16.mxu0 0
  %142 = vmatpush1.bf16.msra.mxu0 0
  %143 = vmatprep.subr.bf16.mxu0 0
  %144 = vmatpush1.bf16.msra.mxu0 0
  %145 = vmatprep.subr.bf16.mxu0 0
  %146 = vmatpush1.bf16.msra.mxu0 0
  %147 = vmatprep.subr.bf16.mxu0 0
  %148 = vmatpush1.bf16.msra.mxu0 0
  %149 = vmatprep.subr.bf16.mxu0 0
  %150 = vmatpush1.bf16.msra.mxu0 0
  %151 = vmatprep.subr.bf16.mxu0 0
  %152 = vmatpush1.bf16.msra.mxu0 0
  %153 = vmatprep.subr.bf16.mxu0 0
  %154 = vmatpush1.bf16.msra.mxu0 0
  %155 = vmatprep.subr.bf16.mxu0 0
  %156 = vmatpush1.bf16.msra.mxu0 0
  %157 = vmatprep.mubr.bf16.mxu0 0
  %158 = vmatmul.mubr.bf16.gmra.mrb[0].mxu0 %v102
  %v159 = vpop.f32.mrb[0].mxu0
  %v160 = vadd.f32 %v46, %v159
  %v161 = vpop.f32.mrb[0].mxu0
  %v162 = vpop.f32.mrb[0].mxu0
  %v163 = vadd.f32 %v46, %v162
  %v164 = vpop.f32.mrb[0].mxu0
  %165 = vmatprep.mubr.bf16.mxu0 0
  %166 = vmatmul.mubr.bf16.gmra.mrb[0].mxu0 %v105
  %v167 = vpop.f32.mrb[0].mxu0
  %v168 = vadd.f32 %v46, %v167
  %v169 = vpop.f32.mrb[0].mxu0
  %v170 = vpop.f32.mrb[0].mxu0
  %v171 = vadd.f32 %v46, %v170
  %v172 = vpop.f32.mrb[0].mxu0
  %173 = vmatprep.mubr.bf16.mxu0 0
  %174 = vmatmul.mubr.bf16.gmra.mrb[0].mxu0 %v108
  %v175 = vpop.f32.mrb[0].mxu0
  %v176 = vadd.f32 %v46, %v175
  %v177 = vpop.f32.mrb[0].mxu0
  %v178 = vpop.f32.mrb[0].mxu0
  %v179 = vadd.f32 %v46, %v178
  %v180 = vpop.f32.mrb[0].mxu0
  %181 = vmatprep.mubr.bf16.mxu0 0
  %182 = vmatmul.mubr.bf16.gmra.mrb[0].mxu0 %v111
  %v183 = vpop.f32.mrb[0].mxu0
  %v184 = vadd.f32 %v46, %v183
  %v185 = vpop.f32.mrb[0].mxu0
  %v186 = vpop.f32.mrb[0].mxu0
  %v187 = vadd.f32 %v46, %v186
  %v188 = vpop.f32.mrb[0].mxu0
  %189 = vmatprep.mubr.bf16.mxu0 0
  %190 = vmatmul.mubr.bf16.gmra.mrb[0].mxu0 %v114
  %v191 = vpop.f32.mrb[0].mxu0
  %v192 = vadd.f32 %v46, %v191
  %v193 = vpop.f32.mrb[0].mxu0
  %v194 = vpop.f32.mrb[0].mxu0
  %v195 = vadd.f32 %v46, %v194
  %v196 = vpop.f32.mrb[0].mxu0
  %197 = vmatprep.mubr.bf16.mxu0 0
  %198 = vmatmul.mubr.bf16.gmra.mrb[0].mxu0 %v117
  %v199 = vpop.f32.mrb[0].mxu0
  %v200 = vadd.f32 %v46, %v199
  %v201 = vpop.f32.mrb[0].mxu0
  %v202 = vpop.f32.mrb[0].mxu0
  %v203 = vadd.f32 %v46, %v202
  %v204 = vpop.f32.mrb[0].mxu0
  %205 = vmatprep.mubr.bf16.mxu0 0
  %206 = vmatmul.mubr.bf16.gmra.mrb[0].mxu0 %v120
  %v207 = vpop.f32.mrb[0].mxu0
  %v208 = vadd.f32 %v46, %v207
  %v209 = vpop.f32.mrb[0].mxu0
  %v210 = vpop.f32.mrb[0].mxu0
  %v211 = vadd.f32 %v46, %v210
  %v212 = vpop.f32.mrb[0].mxu0
  %213 = vmatprep.mubr.bf16.mxu0 0
  %214 = vmatmul.mubr.bf16.gmra.mrb[0].mxu0 %v123
  %v215 = vpop.f32.mrb[0].mxu0
  %v216 = vadd.f32 %v46, %v215
  %v217 = vpop.f32.mrb[0].mxu0
  %v218 = vpop.f32.mrb[0].mxu0
  %v219 = vadd.f32 %v46, %v218
  %v220 = vpop.f32.mrb[0].mxu0
  %221 = vdwg.mxu0
  %vm222 = vcmp.gt.f32.partialorder %v160, 0.0
  %vm223 = vcmp.gt.f32.partialorder %v163, 0.0
  %vm224 = vcmp.gt.f32.partialorder %v168, 0.0
  %vm225 = vcmp.gt.f32.partialorder %v171, 0.0
  %vm226 = vcmp.gt.f32.partialorder %v176, 0.0
  %vm227 = vcmp.gt.f32.partialorder %v179, 0.0
  %vm228 = vcmp.gt.f32.partialorder %v184, 0.0
  %vm229 = vcmp.gt.f32.partialorder %v187, 0.0
  %vm230 = vcmp.gt.f32.partialorder %v192, 0.0
  %vm231 = vcmp.gt.f32.partialorder %v195, 0.0
  %vm232 = vcmp.gt.f32.partialorder %v200, 0.0
  %vm233 = vcmp.gt.f32.partialorder %v203, 0.0
  %vm234 = vcmp.gt.f32.partialorder %v208, 0.0
  %vm235 = vcmp.gt.f32.partialorder %v211, 0.0
  %vm236 = vcmp.gt.f32.partialorder %v216, 0.0
  %vm237 = vcmp.gt.f32.partialorder %v219, 0.0
  %v238 = vmul.f32 %v160, 0.01
  %v239 = vmul.f32 %v163, 0.01
  %v240 = vmul.f32 %v168, 0.01
  %v241 = vmul.f32 %v171, 0.01
  %v242 = vmul.f32 %v176, 0.01
  %v243 = vmul.f32 %v179, 0.01
  %v244 = vmul.f32 %v184, 0.01
  %v245 = vmul.f32 %v187, 0.01
  %v246 = vmul.f32 %v192, 0.01
  %v247 = vmul.f32 %v195, 0.01
  %v248 = vmul.f32 %v200, 0.01
  %v249 = vmul.f32 %v203, 0.01
  %v250 = vmul.f32 %v208, 0.01
  %v251 = vmul.f32 %v211, 0.01
  %v252 = vmul.f32 %v216, 0.01
  %v253 = vmul.f32 %v219, 0.01
  %v254 = vsel %vm222, %v160, %v238
  %v255 = vsel %vm223, %v163, %v239
  %v256 = vsel %vm224, %v168, %v240
  %v257 = vsel %vm225, %v171, %v241
  %v258 = vsel %vm226, %v176, %v242
  %v259 = vsel %vm227, %v179, %v243
  %v260 = vsel %vm228, %v184, %v244
  %v261 = vsel %vm229, %v187, %v245
  %v262 = vsel %vm230, %v192, %v246
  %v263 = vsel %vm231, %v195, %v247
  %v264 = vsel %vm232, %v200, %v248
  %v265 = vsel %vm233, %v203, %v249
  %v266 = vsel %vm234, %v208, %v250
  %v267 = vsel %vm235, %v211, %v251
  %v268 = vsel %vm236, %v216, %v252
  %v269 = vsel %vm237, %v219, %v253
  %v270 = vpack.c.bf16 %v255, %v254
  %v271 = vpack.c.bf16 %v257, %v256
  %v272 = vpack.c.bf16 %v259, %v258
  %v273 = vpack.c.bf16 %v261, %v260
  %v274 = vpack.c.bf16 %v263, %v262
  %v275 = vpack.c.bf16 %v265, %v264
  %v276 = vpack.c.bf16 %v267, %v266
  %v277 = vpack.c.bf16 %v269, %v268
  %v278 = vld [vmem:[%s3] sm:$0xf]
  %v279 = vld [vmem:[%s3 + $0x4] sm:$0xf]
  %v280 = vld [vmem:[%s3 + $0x8] sm:$0xf]
  %v281 = vld [vmem:[%s3 + $0xc] sm:$0xf]
  %v282 = vld [vmem:[%s4] sm:$0x1]
  %v284 = vlaneseq
  %v285 = vshrl.u32 %v284, 7
  %v286 = vsub.s32 0, %v285
  %v287 = vrot.slane %v282, %v286
  %v293 = vunpack.c.l.b16 %v278
  %v294 = vunpack.c.l.b16 %v279
  %v295 = vunpack.c.l.b16 %v280
  %v296 = vunpack.c.l.b16 %v281
  %v297 = vpack.c.b16 %v294, %v293
  %v298 = vpack.c.b16 %v296, %v295
  %v302 = vsel %vm100, %v270, 0
  %v305 = vsel %vm100, %v271, 0
  %v308 = vsel %vm100, %v272, 0
  %v311 = vsel %vm100, %v273, 0
  %v314 = vsel %vm100, %v274, 0
  %v317 = vsel %vm100, %v275, 0
  %v320 = vsel %vm100, %v276, 0
  %v323 = vsel %vm100, %v277, 0
  %325 = vmatprep.subr.bf16.mxu0 0
  %326 = vmatpush1.bf16.msra.mxu0 %v297
  %327 = vmatprep.subr.bf16.mxu0 0
  %328 = vmatpush1.bf16.msra.mxu0 %v298
  %329 = vmatprep.subr.bf16.mxu0 0
  %330 = vmatpush1.bf16.msra.mxu0 0
  %331 = vmatprep.subr.bf16.mxu0 0
  %332 = vmatpush1.bf16.msra.mxu0 0
  %333 = vmatprep.subr.bf16.mxu0 0
  %334 = vmatpush1.bf16.msra.mxu0 0
  %335 = vmatprep.subr.bf16.mxu0 0
  %336 = vmatpush1.bf16.msra.mxu0 0
  %337 = vmatprep.subr.bf16.mxu0 0
  %338 = vmatpush1.bf16.msra.mxu0 0
  %339 = vmatprep.subr.bf16.mxu0 0
  %340 = vmatpush1.bf16.msra.mxu0 0
  %341 = vmatprep.subr.bf16.mxu0 0
  %342 = vmatpush1.bf16.msra.mxu0 0
  %343 = vmatprep.subr.bf16.mxu0 0
  %344 = vmatpush1.bf16.msra.mxu0 0
  %345 = vmatprep.subr.bf16.mxu0 0
  %346 = vmatpush1.bf16.msra.mxu0 0
  %347 = vmatprep.subr.bf16.mxu0 0
  %348 = vmatpush1.bf16.msra.mxu0 0
  %349 = vmatprep.subr.bf16.mxu0 0
  %350 = vmatpush1.bf16.msra.mxu0 0
  %351 = vmatprep.subr.bf16.mxu0 0
  %352 = vmatpush1.bf16.msra.mxu0 0
  %353 = vmatprep.subr.bf16.mxu0 0
  %354 = vmatpush1.bf16.msra.mxu0 0
  %355 = vmatprep.subr.bf16.mxu0 0
  %356 = vmatpush1.bf16.msra.mxu0 0
  %357 = vmatprep.mubr.bf16.mxu0 0
  %358 = vmatmul.mubr.bf16.gmra.mrb[0].mxu0 %v302
  %v359 = vpop.f32.mrb[0].mxu0
  %v360 = vadd.f32 %v287, %v359
  %v361 = vpop.f32.mrb[0].mxu0
  %v362 = vpop.f32.mrb[0].mxu0
  %v363 = vadd.f32 %v287, %v362
  %v364 = vpop.f32.mrb[0].mxu0
  %365 = vmatprep.mubr.bf16.mxu0 0
  %366 = vmatmul.mubr.bf16.gmra.mrb[0].mxu0 %v305
  %v367 = vpop.f32.mrb[0].mxu0
  %v368 = vadd.f32 %v287, %v367
  %v369 = vpop.f32.mrb[0].mxu0
  %v370 = vpop.f32.mrb[0].mxu0
  %v371 = vadd.f32 %v287, %v370
  %v372 = vpop.f32.mrb[0].mxu0
  %373 = vmatprep.mubr.bf16.mxu0 0
  %374 = vmatmul.mubr.bf16.gmra.mrb[0].mxu0 %v308
  %v375 = vpop.f32.mrb[0].mxu0
  %v376 = vadd.f32 %v287, %v375
  %v377 = vpop.f32.mrb[0].mxu0
  %v378 = vpop.f32.mrb[0].mxu0
  %v379 = vadd.f32 %v287, %v378
  %v380 = vpop.f32.mrb[0].mxu0
  %381 = vmatprep.mubr.bf16.mxu0 0
  %382 = vmatmul.mubr.bf16.gmra.mrb[0].mxu0 %v311
  %v383 = vpop.f32.mrb[0].mxu0
  %v384 = vadd.f32 %v287, %v383
  %v385 = vpop.f32.mrb[0].mxu0
  %v386 = vpop.f32.mrb[0].mxu0
  %v387 = vadd.f32 %v287, %v386
  %v388 = vpop.f32.mrb[0].mxu0
  %389 = vmatprep.mubr.bf16.mxu0 0
  %390 = vmatmul.mubr.bf16.gmra.mrb[0].mxu0 %v314
  %v391 = vpop.f32.mrb[0].mxu0
  %v392 = vadd.f32 %v287, %v391
  %v393 = vpop.f32.mrb[0].mxu0
  %v394 = vpop.f32.mrb[0].mxu0
  %v395 = vadd.f32 %v287, %v394
  %v396 = vpop.f32.mrb[0].mxu0
  %397 = vmatprep.mubr.bf16.mxu0 0
  %398 = vmatmul.mubr.bf16.gmra.mrb[0].mxu0 %v317
  %v399 = vpop.f32.mrb[0].mxu0
  %v400 = vadd.f32 %v287, %v399
  %v401 = vpop.f32.mrb[0].mxu0
  %v402 = vpop.f32.mrb[0].mxu0
  %v403 = vadd.f32 %v287, %v402
  %v404 = vpop.f32.mrb[0].mxu0
  %405 = vmatprep.mubr.bf16.mxu0 0
  %406 = vmatmul.mubr.bf16.gmra.mrb[0].mxu0 %v320
  %v407 = vpop.f32.mrb[0].mxu0
  %v408 = vadd.f32 %v287, %v407
  %v409 = vpop.f32.mrb[0].mxu0
  %v410 = vpop.f32.mrb[0].mxu0
  %v411 = vadd.f32 %v287, %v410
  %v412 = vpop.f32.mrb[0].mxu0
  %413 = vmatprep.mubr.bf16.mxu0 0
  %414 = vmatmul.mubr.bf16.gmra.mrb[0].mxu0 %v323
  %v415 = vpop.f32.mrb[0].mxu0
  %v416 = vadd.f32 %v287, %v415
  %v417 = vpop.f32.mrb[0].mxu0
  %v418 = vpop.f32.mrb[0].mxu0
  %v419 = vadd.f32 %v287, %v418
  %v420 = vpop.f32.mrb[0].mxu0
  %421 = vdwg.mxu0
  %422 = vst [vmem:[%s5] sm:$0xff] %v360
  %423 = vst [vmem:[%s5 + $0x8] sm:$0xff] %v363
  %424 = vst [vmem:[%s5 + $0x10] sm:$0xff] %v368
  %425 = vst [vmem:[%s5 + $0x18] sm:$0xff] %v371
  %426 = vst [vmem:[%s5 + $0x20] sm:$0xff] %v376
  %427 = vst [vmem:[%s5 + $0x28] sm:$0xff] %v379
  %428 = vst [vmem:[%s5 + $0x30] sm:$0xff] %v384
  %429 = vst [vmem:[%s5 + $0x38] sm:$0xff] %v387
  %430 = vst [vmem:[%s5 + $0x40] sm:$0xff] %v392
  %431 = vst [vmem:[%s5 + $0x48] sm:$0xff] %v395
  %432 = vst [vmem:[%s5 + $0x50] sm:$0xff] %v400
  %433 = vst [vmem:[%s5 + $0x58] sm:$0xff] %v403
  %434 = vst [vmem:[%s5 + $0x60] sm:$0xff] %v408
  %435 = vst [vmem:[%s5 + $0x68] sm:$0xff] %v411
  %436 = vst [vmem:[%s5 + $0x70] sm:$0xff] %v416
  %437 = vst [vmem:[%s5 + $0x78] sm:$0xff] %v419
  // Predicated region
  $region22: #{forward.5} parent=0 // pred_check
    _
  $region23: #{forward.5} parent=0 // pred_check_branch
    %439 = sbr.rel (0) target = $region25
  $region24: #{forward.5} parent=0 // pred_region
    _
  $region25: #{forward.5} parent=0 // pred_fallthru
    _
  // Predicated region
  $region26: #{forward.5} parent=0 // pred_check
    _
  $region27: #{forward.5} parent=0 // pred_check_branch
    %441 = sbr.rel (0) target = $region29
  $region28: #{forward.5} parent=0 // pred_region
    _
  $region29: #{forward.5} parent=0 // pred_fallthru
    _

// kernel: forward.4
$region0: #{forward.4}
  #allocation0 [shape = 'u32[]', space=smem, size = 0x4, offset = 0x4, fixed_abs, tag = 'smem constant byte address 0x4 - core index']
  #allocation1 [shape = 'u32[144,128]{1,0:T(1,128)}', space=vmem, size = 0x12000, scoped, tag = 'internal scratch']
  %s0 = inlined_call_operand.vmem [shape: f32[2,4,256], index: 0, kind: input, shape index: {}]
  %s1 = inlined_call_operand.vmem [shape: f32[2,8,4], index: 1, kind: input, shape index: {}]
  %s2 = inlined_call_operand.vmem [shape: f32[2,8,256], index: 2, kind: output, shape index: {}]
  %s3 = sld [smem:[#allocation0]]
  $region41: #{forward.4} parent=0
    _
  %s5 = ssub.s32 1, %s3
  %s6 = scalar_select 0, %s5, %s3
  loop: start=0, step=1, limit=6
  $region2: #{forward.4} parent=0 // loop_pre_header
    _
  $region3: #{forward.4} parent=0 // loop_header
    %s8 = sphi 0, %s12
    %p9 = scmp.ge.s32.totalorder %s8, 6
    %s15 = sphi 0, %s27
    %s16 = sphi 0, %s23
    %s17 = sphi 0, %s15
    %s18 = sphi 0, %s16
    %s19 = sphi 0, %s17
    %s20 = sphi 0, %s18
    %s32 = sphi 0, %s34
    %s35 = sphi 0, %s32
    %s36 = sphi 0, %s35
    %s52 = sphi 0, %s36
    %s58 = sphi 0, %s60
    %s61 = sphi 0, %s58
    %s62 = sphi 0, %s61
    %s78 = sphi 0, %s62
    %s86 = sphi 0, %s88
    %s89 = sphi 0, %s86
    %s90 = sphi 0, %s89
    %s106 = sphi 0, %s90
  $region4: #{forward.4} parent=0 // loop_header_branch
    %11 = sbr.rel (%p9) target = $region8
  $region5: #{forward.4} parent=0 // loop_body
    %s13 = ssub.s32 %s8, 1
    %s14 = ssub.s32 %s8, 2
    %s21 = sadd.s32 1, %s16
    %p22 = scmp.ge.s32.totalorder %s21, 2
    %s23 = scalar_select %p22, 0, %s21
    %s24 = sadd.s32 1, %s15
    %s25 = scalar_select %p22, %s24, %s15
    %p26 = scmp.ge.s32.totalorder %s25, 2
    %s27 = scalar_select %p26, 0, %s25
    %s28 = ssub.s32 %s15, %s27
    %s29 = ssub.s32 %s16, %s23
    %s30 = sor.u32 %s28, %s29
    %p31 = scmp.eq.s32.totalorder %s30, 0
    %s33 = sadd.s32 %s32, 1
    %s34 = scalar_select %p31, %s32, %s33
    %p37 = pneg %p31
    %p38 = scmp.eq.s32.totalorder %s8, 3
    %p39 = por %p37, %p38
    %p40 = scmp.ne.s32.totalorder %s32, %s35
    %p41 = scmp.eq.s32.totalorder %s8, 0
    %p42 = por %p40, %p41
    %p43 = scmp.ne.s32.totalorder %s32, %s35
    %p44 = scmp.eq.s32.totalorder %s13, 3
    %p45 = por %p43, %p44
    %p46 = scmp.ne.s32.totalorder %s35, %s36
    %p47 = scmp.eq.s32.totalorder %s13, 0
    %p48 = por %p46, %p47
    %p49 = scmp.ne.s32.totalorder %s35, %s36
    %p50 = scmp.eq.s32.totalorder %s14, 3
    %p51 = por %p49, %p50
    %p53 = scmp.ne.s32.totalorder %s36, %s52
    %p54 = scmp.eq.s32.totalorder %s14, 0
    %p55 = por %p53, %p54
    %s56 = ssub.s32 %s15, %s27
    %p57 = scmp.eq.s32.totalorder %s56, 0
    %s59 = sadd.s32 %s58, 1
    %s60 = scalar_select %p57, %s58, %s59
    %p63 = pneg %p57
    %p64 = scmp.eq.s32.totalorder %s8, 3
    %p65 = por %p63, %p64
    %p66 = scmp.ne.s32.totalorder %s58, %s61
    %p67 = scmp.eq.s32.totalorder %s8, 0
    %p68 = por %p66, %p67
    %p69 = scmp.ne.s32.totalorder %s58, %s61
    %p70 = scmp.eq.s32.totalorder %s13, 3
    %p71 = por %p69, %p70
    %p72 = scmp.ne.s32.totalorder %s61, %s62
    %p73 = scmp.eq.s32.totalorder %s13, 0
    %p74 = por %p72, %p73
    %p75 = scmp.ne.s32.totalorder %s61, %s62
    %p76 = scmp.eq.s32.totalorder %s14, 3
    %p77 = por %p75, %p76
    %p79 = scmp.ne.s32.totalorder %s62, %s78
    %p80 = scmp.eq.s32.totalorder %s14, 0
    %p81 = por %p79, %p80
    %s82 = ssub.s32 %s15, %s27
    %s83 = ssub.s32 %s16, %s23
    %s84 = sor.u32 %s82, %s83
    %p85 = scmp.eq.s32.totalorder %s84, 0
    %s87 = sadd.s32 %s86, 1
    %s88 = scalar_select %p85, %s86, %s87
    %p91 = pneg %p85
    %p92 = scmp.eq.s32.totalorder %s8, 3
    %p93 = por %p91, %p92
    %p94 = scmp.ne.s32.totalorder %s86, %s89
    %p95 = scmp.eq.s32.totalorder %s8, 0
    %p96 = por %p94, %p95
    %p97 = scmp.ne.s32.totalorder %s86, %s89
    %p98 = scmp.eq.s32.totalorder %s13, 3
    %p99 = por %p97, %p98
    %p100 = scmp.ne.s32.totalorder %s89, %s90
    %p101 = scmp.eq.s32.totalorder %s13, 0
    %p102 = por %p100, %p101
    %p103 = scmp.ne.s32.totalorder %s89, %s90
    %p104 = scmp.eq.s32.totalorder %s14, 3
    %p105 = por %p103, %p104
    %p107 = scmp.ne.s32.totalorder %s90, %s106
    %p108 = scmp.eq.s32.totalorder %s14, 0
    %p109 = por %p107, %p108
    %p110 = scmp.le.s32.totalorder 1, %s8
    %p111 = scmp.lt.s32.totalorder %s8, 5
    %p112 = pnand %p110, %p111
    %p113 = pneg %p112
    // Predicated region
    $region9: #{forward.4} parent=5 // pred_check
      _
    $region10: #{forward.4} parent=5 // pred_check_branch
      %115 = sbr.rel (%p112) target = $region12
    $region11: #{forward.4} parent=5 // pred_region
      %s116 = ssub.s32 %s8, 1
    $region12: #{forward.4} parent=5 // pred_fallthru
      _
    %p117 = scmp.lt.s32.totalorder %s8, 4
    // Predicated region
    $region13: #{forward.4} parent=5 // pred_check
      %p118 = pneg %p117
    $region14: #{forward.4} parent=5 // pred_check_branch
      %120 = sbr.rel (%p118) target = $region16
    $region15: #{forward.4} parent=5 // pred_region
      // Predicated region
      $region17: #{forward.4} parent=15 // pred_check
        %p121 = pneg %p42
      $region18: #{forward.4} parent=15 // pred_check_branch
        %123 = sbr.rel (%p121) target = $region20
      $region19: #{forward.4} parent=15 // pred_region
        %p124 = scmp.lt.s32.totalorder %s15, 1
        %s125 = scalar_select %p124, %s15, 1
        %p126 = scmp.lt.s32.totalorder %s16, 1
        %s127 = scalar_select %p126, %s16, 1
        %s128 = smul.addr %s125, 2
        %s129 = sadd.s32 %s127, %s128
        %s130 = smul.addr %s129, 4
        %s131 = scalar_lea.vmem %s0, %s130
      $region20: #{forward.4} parent=15 // pred_fallthru
        _
      // Predicated region
      $region21: #{forward.4} parent=15 // pred_check
        %p132 = pneg %p68
      $region22: #{forward.4} parent=15 // pred_check_branch
        %134 = sbr.rel (%p132) target = $region24
      $region23: #{forward.4} parent=15 // pred_region
        %p135 = scmp.lt.s32.totalorder %s15, 1
        %s136 = scalar_select %p135, %s15, 1
        %s137 = smul.addr %s136, 8
        %s138 = scalar_lea.vmem %s1, %s137
      $region24: #{forward.4} parent=15 // pred_fallthru
        _
    $region16: #{forward.4} parent=5 // pred_fallthru
      _
    %p139 = scmp.le.s32.totalorder 1, %s8
    %p140 = scmp.lt.s32.totalorder %s8, 5
    %p141 = pnand %p139, %p140
    %p142 = pneg %p141
    // Predicated region
    $region25: #{forward.4} parent=5 // pred_check
      _
    $region26: #{forward.4} parent=5 // pred_check_branch
      %144 = sbr.rel (%p141) target = $region28
    $region27: #{forward.4} parent=5 // pred_region
      %s145 = ssub.s32 %s8, 1
      %p146 = scmp.lt.s32.totalorder %s17, 1
      %s147 = scalar_select %p146, %s17, 1
      %p148 = scmp.lt.s32.totalorder %s18, 1
      %s149 = scalar_select %p148, %s18, 1
      %s150 = smul.addr %s147, 2
      %s151 = sadd.s32 %s149, %s150
      %s152 = smul.addr %s151, 4
      %s153 = scalar_lea.vmem %s0, %s152
      %p154 = pneg %p48
      %p155 = pneg %p45
      %p156 = scmp.lt.s32.totalorder %s17, 1
      %s157 = scalar_select %p156, %s17, 1
      %s158 = smul.addr %s157, 8
      %s159 = scalar_lea.vmem %s1, %s158
      %p160 = pneg %p74
      %p161 = pneg %p71
      %p162 = pneg %p102
      %p163 = pneg %p99
      %p164 = scmp.lt.s32.totalorder %s17, 1
      %s165 = scalar_select %p164, %s17, 1
      %p166 = scmp.lt.s32.totalorder %s18, 1
      %s167 = scalar_select %p166, %s18, 1
      %s168 = smul.addr %s165, 2
      %s169 = sadd.s32 %s167, %s168
      %s170 = smul.addr %s169, 8
      %s171 = scalar_lea.vmem %s2, %s170
      %p172 = scmp.lt.s32.totalorder %s17, 1
      %s173 = scalar_select %p172, %s17, 1
      %p174 = scmp.lt.s32.totalorder %s18, 1
      %s175 = scalar_select %p174, %s18, 1
      %s176 = smul.addr %s173, 2
      %s177 = sadd.s32 %s175, %s176
      %s178 = smul.addr %s177, 4
      %s179 = scalar_lea.vmem %s0, %s178
      %p180 = scmp.lt.s32.totalorder %s17, 1
      %s181 = scalar_select %p180, %s17, 1
      %s182 = smul.addr %s181, 8
      %s183 = scalar_lea.vmem %s1, %s182
      %p184 = scmp.lt.s32.totalorder %s17, 1
      %s185 = scalar_select %p184, %s17, 1
      %p186 = scmp.lt.s32.totalorder %s18, 1
      %s187 = scalar_select %p186, %s18, 1
      %s188 = smul.addr %s185, 2
      %s189 = sadd.s32 %s187, %s188
      %s190 = smul.addr %s189, 8
      %s191 = scalar_lea.vmem %s2, %s190
      %v192 = vld [vmem:[%s179] sm:$0xf]
      %v193 = vld [vmem:[%s183] sm:$0xff]
      %v194 = vlaneseq
      %v195 = vshrl.u32 %v194, 7
      %v196 = vsub.s32 0, %v195
      %v197 = vrot.slane %v192, %v196
      %199 = vset.pattern.permute.xlu0 0
      %200 = vperm.xlu0 %199, %v193
      %v201 = vpop.permute.xlu0 %200
      %v203 = vmax.f32 %v197, %v201
      %v204 = vlaneseq
      %v205 = vshrl.u32 %v204, 7
      %v206 = vsub.s32 1, %v205
      %v207 = vrot.slane %v192, %v206
      %208 = vset.pattern.permute.xlu0 1
      %209 = vperm.xlu0 %208, %v193
      %v210 = vpop.permute.xlu0 %209
      %v212 = vmax.f32 %v207, %v210
      %v213 = vlaneseq
      %v214 = vshrl.u32 %v213, 7
      %v215 = vsub.s32 2, %v214
      %v216 = vrot.slane %v192, %v215
      %217 = vset.pattern.permute.xlu0 2
      %218 = vperm.xlu0 %217, %v193
      %v219 = vpop.permute.xlu0 %218
      %v221 = vmin.f32 %v216, %v219
      %v222 = vlaneseq
      %v223 = vshrl.u32 %v222, 7
      %v224 = vsub.s32 3, %v223
      %v225 = vrot.slane %v192, %v224
      %226 = vset.pattern.permute.xlu0 3
      %227 = vperm.xlu0 %226, %v193
      %v228 = vpop.permute.xlu0 %227
      %v230 = vmin.f32 %v225, %v228
      %v231 = vsub.f32 %v221, %v203
      %v232 = vmax.f32 %v231, 0.0
      %v233 = vsub.f32 %v230, %v212
      %v234 = vmax.f32 %v233, 0.0
      %v235 = vmul.f32 %v232, %v234
      %v237 = vrot.slane %v192, 6
      %v239 = vsub.f32 %v192, %v237
      %v241 = vrot.slane %v239, 1
      %v243 = vmul.f32 %v239, %v241
      %244 = vrot.lane.b32.xlu0 %v193, 2
      %v245 = vpop.permute.xlu0 %244
      %v247 = vsub.f32 %v193, %v245
      %249 = vrot.lane.b32.xlu0 %v247, 127
      %v250 = vpop.permute.xlu0 %249
      %v252 = vmul.f32 %v247, %v250
      %v253 = vlaneseq
      %v254 = vshrl.u32 %v253, 7
      %v255 = vsub.s32 2, %v254
      %v256 = vrot.slane %v243, %v255
      %258 = vset.pattern.permute.xlu0 2
      %259 = vperm.xlu0 %258, %v252
      %v260 = vpop.permute.xlu0 %259
      %v262 = vadd.f32 %v256, %v260
      %v263 = vsub.f32 %v262, %v235
      %v264 = vadd.f32 %v263, 1e-08
      %v265 = vrcp.pop %v264
      %v266 = vmul.f32 %v235, %v265
      %267 = vst [vmem:[%s191] sm:$0xff] %v266
      %p268 = scmp.lt.s32.totalorder %s17, 1
      %s269 = scalar_select %p268, %s17, 1
      %p270 = scmp.lt.s32.totalorder %s18, 1
      %s271 = scalar_select %p270, %s18, 1
      %s272 = smul.addr %s269, 2
      %s273 = sadd.s32 %s271, %s272
      %s274 = smul.addr %s273, 8
      %s275 = scalar_lea.vmem %s2, %s274
      // Predicated region
      $region29: #{forward.4} parent=27 // pred_check
        %p276 = pneg %p99
      $region30: #{forward.4} parent=27 // pred_check_branch
        %278 = sbr.rel (%p276) target = $region32
      $region31: #{forward.4} parent=27 // pred_region
        _
      $region32: #{forward.4} parent=27 // pred_fallthru
        _
    $region28: #{forward.4} parent=5 // pred_fallthru
      _
    %p279 = scmp.le.s32.totalorder 2, %s8
    // Predicated region
    $region33: #{forward.4} parent=5 // pred_check
      %p280 = pneg %p279
    $region34: #{forward.4} parent=5 // pred_check_branch
      %282 = sbr.rel (%p280) target = $region36
    $region35: #{forward.4} parent=5 // pred_region
      %s283 = ssub.s32 %s8, 2
      // Predicated region
      $region37: #{forward.4} parent=35 // pred_check
        %p284 = pneg %p105
      $region38: #{forward.4} parent=35 // pred_check_branch
        %286 = sbr.rel (%p284) target = $region40
      $region39: #{forward.4} parent=35 // pred_region
        %p287 = scmp.lt.s32.totalorder %s19, 1
        %s288 = scalar_select %p287, %s19, 1
        %p289 = scmp.lt.s32.totalorder %s20, 1
        %s290 = scalar_select %p289, %s20, 1
        %s291 = smul.addr %s288, 2
        %s292 = sadd.s32 %s290, %s291
        %s293 = smul.addr %s292, 8
        %s294 = scalar_lea.vmem %s2, %s293
      $region40: #{forward.4} parent=35 // pred_fallthru
        _
    $region36: #{forward.4} parent=5 // pred_fallthru
      _
  $region6: #{forward.4} parent=0 // loop_footer
    %s12 = sadd.s32 1, %s8
  $region7: #{forward.4} parent=0 // loop_footer_branch
    %7 = sbr.rel target = $region3
  $region8: #{forward.4} parent=0 // loop_exit
    _

// kernel: forward.6
$region0: #{forward.6}
  #allocation0 [shape = 'u32[]', space=smem, size = 0x4, offset = 0x4, fixed_abs, tag = 'smem constant byte address 0x4 - core index']
  #allocation1 [shape = 'u32[144,128]{1,0:T(1,128)}', space=vmem, size = 0x12000, scoped, tag = 'internal scratch']
  %s0 = inlined_call_operand.vmem [shape: f32[8,128], index: 0, kind: input, shape index: {}]
  %s1 = inlined_call_operand.vmem [shape: f32[8,128], index: 1, kind: input, shape index: {}]
  %s2 = inlined_call_operand.hbm [shape: f32[1,1], index: 2, kind: output, shape index: {}]
  %s3 = sld [smem:[#allocation0]]
  $region18: #{forward.6} parent=0
    _
  %s5 = ssub.s32 1, %s3
  %s6 = scalar_select 0, %s5, %s3
  $region1: #{forward.6} parent=0
    #allocation2 [shape = 'u8[512]{0}', space=vmem, size = 0x400, scoped, tag = 'output window, operand 0, single buffered']
    #allocation3 [shape = 's32[1]{0}', space=sflag, size = 0x4, scoped, tag = 'scoped memory for forward.6']
    %7 = vsyncpa [#allocation3], 0
    // Predicated region
    $region2: #{forward.6} parent=1 // pred_check
      _
    $region3: #{forward.6} parent=1 // pred_check_branch
      %9 = sbr.rel (0) target = $region5
    $region4: #{forward.6} parent=1 // pred_region
      _
    $region5: #{forward.6} parent=1 // pred_fallthru
      _
    // Predicated region
    $region6: #{forward.6} parent=1 // pred_check
      _
    $region7: #{forward.6} parent=1 // pred_check_branch
      %11 = sbr.rel (0) target = $region9
    $region8: #{forward.6} parent=1 // pred_region
      _
    $region9: #{forward.6} parent=1 // pred_fallthru
      _
    %v12 = vld [vmem:[%s0] sm:$0xff]
    %v13 = vld [vmem:[%s1] sm:$0xff]
    %v14 = vsub.f32 %v12, %v13
    %v15 = vmul.f32 %v14, %v14
    %16 = vadd.xlane.f32.xlu0 %v15
    %v17 = vpop.xlane.xlu0 %16
    %v18 = vrot.slane %v17, 4
    %v19 = vadd.f32 %v17, %v18
    %v20 = vrot.slane %v19, 2
    %v21 = vadd.f32 %v19, %v20
    %v22 = vrot.slane %v21, 1
    %v23 = vadd.f32 %v21, %v22
    %vm24 = vcmask 0
    %25 = vst.msk [vmem:[#allocation2] sm:$0x1] %vm24, %v23
    // Predicated region
    $region10: #{forward.6} parent=1 // pred_check
      _
    $region11: #{forward.6} parent=1 // pred_check_branch
      %27 = sbr.rel (0) target = $region13
    $region12: #{forward.6} parent=1 // pred_region
      %s29 = ssub.s32 16, 16
      %30 = vsyncadd [#allocation3], %s29
      %s32 = sshll.u32 [#allocation2], 4
      %s33 = int_to_ptr.vmem [resolvable:$true] %s32
      %35 = dma.vmem_to_hbm [thread:$0]  %s33, 16, %s2, [#allocation3]
    $region13: #{forward.6} parent=1 // pred_fallthru
      _
    // Predicated region
    $region14: #{forward.6} parent=1 // pred_check
      _
    $region15: #{forward.6} parent=1 // pred_check_branch
      %37 = sbr.rel (0) target = $region17
    $region16: #{forward.6} parent=1 // pred_region
      %38 = dma.done [#allocation3], 16
    $region17: #{forward.6} parent=1 // pred_fallthru
      _
    %39 = vsyncpa [#allocation3], 1

// kernel: custom-call.10
$region0: #{custom-call.10}
  %s0 = inlined_call_operand.vmem [shape: f32[6,20], index: 0, kind: output, shape index: {}]

</llo_original>
